<compile_context>
chip_gen: v5e
topology: v5e:2x2
jax: 0.10.0
libtpu: 0.0.40
codegen_flags: <defaults>
</compile_context>

<pallas_src>
import functools

import jax
import jax.numpy as jnp
from jax.experimental import pallas as pl
from jax.experimental.pallas import tpu as pltpu


def _cls_kernel(x_ref, w1_ref, b1_ref, gamma_ref, beta_ref, w2_ref, b2_ref,
                feat_ref, logit_ref, prob_ref,
                h_cache, sum_ref, ssq_ref, scale_ref, shift_ref,
                *, batch, tile_b, batch_is_padded):
    phase = pl.program_id(0)   # 0: statistics pass, 1: output pass
    t = pl.program_id(1)       # batch-tile index

    @pl.when(phase == 0)
    def _stats_pass():
        @pl.when(t == 0)
        def _init():
            sum_ref[...] = jnp.zeros_like(sum_ref)
            ssq_ref[...] = jnp.zeros_like(ssq_ref)

        # bottleneck Linear: bf16 MXU inputs, f32 accumulation.
        h = jnp.dot(x_ref[...], w1_ref[...],
                    preferred_element_type=jnp.float32) + b1_ref[...]
        h_cache[t] = h

        if batch_is_padded:
            # Exclude zero-padded batch rows from the BN statistics.
            rows = t * tile_b + jax.lax.broadcasted_iota(jnp.int32, h.shape, 0)
            h_valid = jnp.where(rows < batch, h, 0.0)
        else:
            h_valid = h
        sum_ref[...] += jnp.sum(h_valid, axis=0, keepdims=True)
        ssq_ref[...] += jnp.sum(h_valid * h, axis=0, keepdims=True)

    @pl.when(phase == 1)
    def _output_pass():
        @pl.when(t == 0)
        def _finalize_stats():
            inv_n = jnp.float32(1.0 / batch)
            mean = sum_ref[...] * inv_n
            var = ssq_ref[...] * inv_n - mean * mean       # biased batch var
            scale = gamma_ref[...] * jax.lax.rsqrt(var + 1e-5)
            scale_ref[...] = scale
            shift_ref[...] = beta_ref[...] - mean * scale

        # BatchNorm folded into one fused multiply-add over the tile.
        feat = h_cache[t] * scale_ref[...] + shift_ref[...]
        feat_ref[...] = feat

        # fc Linear.
        logits = jnp.dot(feat.astype(jnp.bfloat16), w2_ref[...],
                         preferred_element_type=jnp.float32) + b2_ref[...]
        logit_ref[...] = logits

        # Softmax (padded logit columns carry a -1e30 bias -> exp() == 0).
        # Exact f32 reciprocal of the row sums so probabilities sum to 1.
        m = jnp.max(logits, axis=-1, keepdims=True)
        e = jnp.exp(logits - m)
        denom = jnp.sum(e, axis=-1, keepdims=True)
        prob_ref[...] = e * (jnp.float32(1.0) / denom)


def _round_up(n, m):
    return ((n + m - 1) // m) * m


@functools.partial(jax.jit, static_argnames=("tile_b",))
def cls_forward(x, w1_t, b1, gamma, beta, w2_t, b2, *, tile_b=None):
    """Returns [x, bn(bottleneck(x)), fc(...), softmax(...)] (train-mode BN)."""
    B, in_dim = x.shape
    bn_dim = w1_t.shape[1]
    out_dim = w2_t.shape[1]

    LANE = 128
    in_p = _round_up(in_dim, LANE)
    bn_p = _round_up(bn_dim, LANE)
    out_p = _round_up(out_dim, LANE)

    if tile_b is None:
        tile_b = min(_round_up(B, 16), 512)
    tile_b = max(16, (tile_b // 16) * 16)     # bf16 sublane-friendly tile
    B_p = _round_up(B, tile_b)
    T = B_p // tile_b

    f32, bf16 = jnp.float32, jnp.bfloat16
    # Zero-pad feature axes to lane width; matmul operands go in as bf16.
    xp = jnp.zeros((B_p, in_p), bf16).at[:B, :in_dim].set(x.astype(bf16))
    w1p = jnp.zeros((in_p, bn_p), bf16).at[:in_dim, :bn_dim].set(w1_t.astype(bf16))
    w2p = jnp.zeros((bn_p, out_p), bf16).at[:bn_dim, :out_dim].set(w2_t.astype(bf16))
    b1p = jnp.zeros((1, bn_p), f32).at[:, :bn_dim].set(b1)
    gp = jnp.zeros((1, bn_p), f32).at[:, :bn_dim].set(gamma)
    bp = jnp.zeros((1, bn_p), f32).at[:, :bn_dim].set(beta)
    # Padded logit columns get a huge negative bias so softmax ignores them.
    b2p = jnp.full((1, out_p), -1e30, f32).at[:, :out_dim].set(b2)

    kernel = functools.partial(_cls_kernel, batch=B, tile_b=tile_b,
                               batch_is_padded=(B_p != B))

    # Rough VMEM footprint (double buffers + scratch), clamped below v7x's
    # 64 MiB physical VMEM.
    vmem_bytes = (2 * tile_b * in_p * 2            # x tile (bf16, 2 buffers)
                  + 2 * in_p * bn_p * 2            # W1
                  + 2 * bn_p * out_p * 2           # W2
                  + 2 * 4 * (3 * bn_p + out_p)     # bias / gamma / beta rows
                  + 2 * tile_b * bn_p * 4          # feat out
                  + 2 * 2 * tile_b * out_p * 4     # logits + probs out
                  + T * tile_b * bn_p * 4          # h cache scratch
                  + 4 * bn_p * 4)                  # stats scratch
    vmem_limit = int(min(max(2 * vmem_bytes, 16 * 1024 * 1024),
                         48 * 1024 * 1024))

    cost = pl.CostEstimate(
        flops=2 * B_p * (in_p * bn_p + bn_p * out_p) + 8 * B_p * bn_p,
        transcendentals=B_p * out_p + B_p + bn_p,
        bytes_accessed=(2 * B_p * in_p + 2 * in_p * bn_p + 2 * bn_p * out_p
                        + 4 * (3 * bn_p + out_p)
                        + 4 * B_p * (bn_p + 2 * out_p)),
    )

    feat, logits, probs = pl.pallas_call(
        kernel,
        out_shape=(
            jax.ShapeDtypeStruct((B_p, bn_p), f32),
            jax.ShapeDtypeStruct((B_p, out_p), f32),
            jax.ShapeDtypeStruct((B_p, out_p), f32),
        ),
        grid_spec=pltpu.PrefetchScalarGridSpec(
            num_scalar_prefetch=0,
            grid=(2, T),                       # (phase, batch tile)
            in_specs=[
                # x is only needed in phase 0; phase 1 pins block 0 so the
                # pipeline stops re-fetching it.
                pl.BlockSpec((tile_b, in_p), lambda p, t: ((1 - p) * t, 0)),
                pl.BlockSpec((in_p, bn_p), lambda p, t: (0, 0)),
                pl.BlockSpec((1, bn_p), lambda p, t: (0, 0)),
                pl.BlockSpec((1, bn_p), lambda p, t: (0, 0)),
                pl.BlockSpec((1, bn_p), lambda p, t: (0, 0)),
                pl.BlockSpec((bn_p, out_p), lambda p, t: (0, 0)),
                pl.BlockSpec((1, out_p), lambda p, t: (0, 0)),
            ],
            out_specs=(
                # Stay on block 0 during phase 0 so each output block is
                # written back to HBM exactly once (during phase 1).
                pl.BlockSpec((tile_b, bn_p), lambda p, t: (p * t, 0)),
                pl.BlockSpec((tile_b, out_p), lambda p, t: (p * t, 0)),
                pl.BlockSpec((tile_b, out_p), lambda p, t: (p * t, 0)),
            ),
            scratch_shapes=[
                pltpu.VMEM((T, tile_b, bn_p), f32),   # per-tile h cache
                pltpu.VMEM((1, bn_p), f32),           # sum(h)
                pltpu.VMEM((1, bn_p), f32),           # sum(h*h)
                pltpu.VMEM((1, bn_p), f32),           # BN scale
                pltpu.VMEM((1, bn_p), f32),           # BN shift
            ],
        ),
        compiler_params=pltpu.CompilerParams(
            # Both axes are sequential: phase 1 depends on phase-0 scratch and
            # the BN statistics are shared across batch tiles.  Per-core
            # partial stats + combine would be needed to mark the batch axis
            # parallel for v7x's two TensorCores.
            dimension_semantics=("arbitrary", "arbitrary"),
            vmem_limit_bytes=vmem_limit,
        ),
        cost_estimate=cost,
    )(xp, w1p, b1p, gp, bp, w2p, b2p)

    # TODO(synk): BatchNorm1d running_mean/running_var buffer updates (a train
    # mode side effect in PyTorch) are not emitted; only the forward outputs.
    return [x, feat[:B, :bn_dim], logits[:B, :out_dim], probs[:B, :out_dim]]


def init_params(key, in_dim, out_dim, bottle_neck_dim):
    """Deterministic synthetic parameters (PyTorch-like uniform fan-in init)."""
    k1, k2, k3, k4 = jax.random.split(key, 4)
    bound1 = 1.0 / (in_dim ** 0.5)
    bound2 = 1.0 / (bottle_neck_dim ** 0.5)
    # Stored already transposed: (in_features, out_features).
    w1_t = jax.random.uniform(k1, (in_dim, bottle_neck_dim), jnp.float32,
                              -bound1, bound1)
    b1 = jax.random.uniform(k2, (1, bottle_neck_dim), jnp.float32,
                            -bound1, bound1)
    w2_t = jax.random.uniform(k3, (bottle_neck_dim, out_dim), jnp.float32,
                              -bound2, bound2)
    b2 = jax.random.uniform(k4, (1, out_dim), jnp.float32, -bound2, bound2)
    gamma = jnp.ones((1, bottle_neck_dim), jnp.float32)   # BN weight init
    beta = jnp.zeros((1, bottle_neck_dim), jnp.float32)   # BN bias init
    return w1_t, b1, gamma, beta, w2_t, b2


def _reference(x, w1_t, b1, gamma, beta, w2_t, b2):
    h = x @ w1_t + b1
    mean = jnp.mean(h, axis=0, keepdims=True)
    var = jnp.mean((h - mean) ** 2, axis=0, keepdims=True)
    feat = (h - mean) / jnp.sqrt(var + 1e-5) * gamma + beta
    logits = feat @ w2_t + b2
    probs = jax.nn.softmax(logits, axis=-1)
    return [x, feat, logits, probs]


if __name__ == "__main__":
    # Small shapes consistent with CLS(in_dim, out_dim, bottle_neck_dim).
    # B=30 exercises batch-row padding/masking; the feature dims exercise the
    # lane-padding path (32 -> 128, 64 -> 128, 10 -> 128); tile_b=16 gives a
    # multi-tile two-phase grid (grid = (2, 2)).
    B, IN_DIM, BN_DIM, OUT_DIM = 30, 32, 64, 10

    key = jax.random.PRNGKey(0)
    kx, kp = jax.random.split(key)
    x = jax.random.normal(kx, (B, IN_DIM), jnp.float32)
    params = init_params(kp, IN_DIM, OUT_DIM, BN_DIM)

    outs = jax.block_until_ready(cls_forward(x, *params, tile_b=16))

    refs = _reference(x, *params)
    names = ("x", "bn_feat", "logits", "probs")
    for name, got, want in zip(names, outs, refs):
        assert got.shape == want.shape and got.dtype == want.dtype, name
        # bf16 MXU operands -> compare against the f32 reference with a
        # bf16-level tolerance.
        assert jnp.allclose(got, want, atol=3e-2, rtol=3e-2), f"mismatch: {name}"
    # Exact f32 softmax normalization: rows sum to 1 within f32 rounding.
    assert jnp.allclose(jnp.sum(outs[3], axis=-1), 1.0, atol=1e-3)

    print("KERNEL_OK")
</pallas_src>

<mosaic_0001>
module attributes {stable_mosaic.version = 11 : i64} {
  func.func @_cls_kernel(%arg0: i32, %arg1: i32, %arg2: memref<16x128xbf16, #tpu.memory_space<vmem>>, %arg3: memref<128x128xbf16, #tpu.memory_space<vmem>>, %arg4: memref<1x128xf32, #tpu.memory_space<vmem>>, %arg5: memref<1x128xf32, #tpu.memory_space<vmem>>, %arg6: memref<1x128xf32, #tpu.memory_space<vmem>>, %arg7: memref<128x128xbf16, #tpu.memory_space<vmem>>, %arg8: memref<1x128xf32, #tpu.memory_space<vmem>>, %arg9: memref<16x128xf32, #tpu.memory_space<vmem>>, %arg10: memref<16x128xf32, #tpu.memory_space<vmem>>, %arg11: memref<16x128xf32, #tpu.memory_space<vmem>>, %arg12: memref<2x16x128xf32, #tpu.memory_space<vmem>>, %arg13: memref<1x128xf32, #tpu.memory_space<vmem>>, %arg14: memref<1x128xf32, #tpu.memory_space<vmem>>, %arg15: memref<1x128xf32, #tpu.memory_space<vmem>>, %arg16: memref<1x128xf32, #tpu.memory_space<vmem>>) attributes {dimension_semantics = [#tpu.dimension_semantics<arbitrary>, #tpu.dimension_semantics<arbitrary>], iteration_bounds = array<i64: 2, 2>, scalar_prefetch = 0 : i64, scratch_operands = 5 : i64, tpu.core_type = #tpu.core_type<tc>, window_params = [{transform_indices = @transform_0, window_bounds = array<i64: 16, 128>}, {pipeline_mode = #tpu.pipeline_mode<synchronous>, transform_indices = @transform_1, window_bounds = array<i64: 128, 128>}, {pipeline_mode = #tpu.pipeline_mode<synchronous>, transform_indices = @transform_2, window_bounds = array<i64: 1, 128>}, {pipeline_mode = #tpu.pipeline_mode<synchronous>, transform_indices = @transform_3, window_bounds = array<i64: 1, 128>}, {pipeline_mode = #tpu.pipeline_mode<synchronous>, transform_indices = @transform_4, window_bounds = array<i64: 1, 128>}, {pipeline_mode = #tpu.pipeline_mode<synchronous>, transform_indices = @transform_5, window_bounds = array<i64: 128, 128>}, {pipeline_mode = #tpu.pipeline_mode<synchronous>, transform_indices = @transform_6, window_bounds = array<i64: 1, 128>}, {transform_indices = @transform_7, window_bounds = array<i64: 16, 128>}, {transform_indices = @transform_8, window_bounds = array<i64: 16, 128>}, {transform_indices = @transform_9, window_bounds = array<i64: 16, 128>}]} {
    %c0_i32 = arith.constant 0 : i32
    %0 = arith.cmpi eq, %arg0, %c0_i32 : i32
    %1 = arith.extui %0 : i1 to i32
    %c0_i32_0 = arith.constant 0 : i32
    %2 = arith.cmpi ne, %1, %c0_i32_0 : i32
    scf.if %2 {
      %c0_i32_2 = arith.constant 0 : i32
      %6 = arith.cmpi eq, %arg1, %c0_i32_2 : i32
      %7 = arith.extui %6 : i1 to i32
      %c0_i32_3 = arith.constant 0 : i32
      %8 = arith.cmpi ne, %7, %c0_i32_3 : i32
      scf.if %8 {
        %cst_22 = arith.constant 0.000000e+00 : f32
        %38 = vector.broadcast %cst_22 : f32 to vector<1x128xf32>
        %c0_23 = arith.constant 0 : index
        %c0_24 = arith.constant 0 : index
        %39 = vector.load %arg13[%c0_23, %c0_24] : memref<1x128xf32, #tpu.memory_space<vmem>>, vector<1x128xf32>
        tpu.vector_store %arg13[%c0_23, %c0_24], %38 {strides = array<i32>} : memref<1x128xf32, #tpu.memory_space<vmem>>, vector<1x128xf32>,
        %cst_25 = arith.constant 0.000000e+00 : f32
        %40 = vector.broadcast %cst_25 : f32 to vector<1x128xf32>
        %c0_26 = arith.constant 0 : index
        %c0_27 = arith.constant 0 : index
        %41 = vector.load %arg14[%c0_26, %c0_27] : memref<1x128xf32, #tpu.memory_space<vmem>>, vector<1x128xf32>
        tpu.vector_store %arg14[%c0_26, %c0_27], %40 {strides = array<i32>} : memref<1x128xf32, #tpu.memory_space<vmem>>, vector<1x128xf32>,
      } else {
      }
      %c0 = arith.constant 0 : index
      %c0_4 = arith.constant 0 : index
      %9 = vector.load %arg2[%c0, %c0_4] : memref<16x128xbf16, #tpu.memory_space<vmem>>, vector<16x128xbf16>
      %c0_5 = arith.constant 0 : index
      %c0_6 = arith.constant 0 : index
      %10 = vector.load %arg3[%c0_5, %c0_6] : memref<128x128xbf16, #tpu.memory_space<vmem>>, vector<128x128xbf16>
      %cst = arith.constant dense<0.000000e+00> : vector<16x128xf32>
      %11 = tpu.matmul %9, %10, %cst {dimension_numbers = #tpu.dot_dimension_numbers<[1], [0], [0], [1], [0, 0, 1, 1], [], []>} : vector<16x128xbf16>, vector<128x128xbf16>, vector<16x128xf32> -> vector<16x128xf32>
      %c0_7 = arith.constant 0 : index
      %c0_8 = arith.constant 0 : index
      %12 = vector.load %arg4[%c0_7, %c0_8] : memref<1x128xf32, #tpu.memory_space<vmem>>, vector<1x128xf32>
      %13 = vector.broadcast %12 : vector<1x128xf32> to vector<16x128xf32>
      %14 = arith.addf %11, %13 : vector<16x128xf32>
      %15 = arith.index_cast %arg1 : i32 to index
      %c0_9 = arith.constant 0 : index
      %c0_10 = arith.constant 0 : index
      %16 = vector.load %arg12[%15, %c0_9, %c0_10] : memref<2x16x128xf32, #tpu.memory_space<vmem>>, vector<1x16x128xf32>
      %17 = vector.shape_cast %16 : vector<1x16x128xf32> to vector<16x128xf32>
      %18 = vector.shape_cast %14 : vector<16x128xf32> to vector<1x16x128xf32>
      tpu.vector_store %arg12[%15, %c0_9, %c0_10], %18 {strides = array<i32>} : memref<2x16x128xf32, #tpu.memory_space<vmem>>, vector<1x16x128xf32>,
      %c16_i32 = arith.constant 16 : i32
      %19 = arith.muli %arg1, %c16_i32 : i32
      %20 = tpu.iota {dimensions = array<i32: 0>} : vector<16x128xi32>
      %21 = vector.broadcast %19 : i32 to vector<16x128xi32>
      %22 = arith.addi %21, %20 : vector<16x128xi32>
      %c30_i32 = arith.constant 30 : i32
      %23 = vector.broadcast %c30_i32 : i32 to vector<16x128xi32>
      %24 = arith.cmpi slt, %22, %23 : vector<16x128xi32>
      %cst_11 = arith.constant 0.000000e+00 : f32
      %25 = vector.broadcast %cst_11 : f32 to vector<16x128xf32>
      %26 = arith.select %24, %14, %25 : vector<16x128xi1>, vector<16x128xf32>
      %c0_12 = arith.constant 0 : index
      %c0_13 = arith.constant 0 : index
      %27 = vector.load %arg13[%c0_12, %c0_13] : memref<1x128xf32, #tpu.memory_space<vmem>>, vector<1x128xf32>
      %cst_14 = arith.constant dense<0.000000e+00> : vector<128xf32>
      %28 = vector.multi_reduction <add>, %26, %cst_14 [0] : vector<16x128xf32> to vector<128xf32>
      %29 = vector.shape_cast %28 : vector<128xf32> to vector<1x128xf32>
      %30 = arith.addf %27, %29 : vector<1x128xf32>
      %c0_15 = arith.constant 0 : index
      %c0_16 = arith.constant 0 : index
      %31 = vector.load %arg13[%c0_15, %c0_16] : memref<1x128xf32, #tpu.memory_space<vmem>>, vector<1x128xf32>
      tpu.vector_store %arg13[%c0_15, %c0_16], %30 {strides = array<i32>} : memref<1x128xf32, #tpu.memory_space<vmem>>, vector<1x128xf32>,
      %c0_17 = arith.constant 0 : index
      %c0_18 = arith.constant 0 : index
      %32 = vector.load %arg14[%c0_17, %c0_18] : memref<1x128xf32, #tpu.memory_space<vmem>>, vector<1x128xf32>
      %33 = arith.mulf %26, %14 : vector<16x128xf32>
      %cst_19 = arith.constant dense<0.000000e+00> : vector<128xf32>
      %34 = vector.multi_reduction <add>, %33, %cst_19 [0] : vector<16x128xf32> to vector<128xf32>
      %35 = vector.shape_cast %34 : vector<128xf32> to vector<1x128xf32>
      %36 = arith.addf %32, %35 : vector<1x128xf32>
      %c0_20 = arith.constant 0 : index
      %c0_21 = arith.constant 0 : index
      %37 = vector.load %arg14[%c0_20, %c0_21] : memref<1x128xf32, #tpu.memory_space<vmem>>, vector<1x128xf32>
      tpu.vector_store %arg14[%c0_20, %c0_21], %36 {strides = array<i32>} : memref<1x128xf32, #tpu.memory_space<vmem>>, vector<1x128xf32>,
    } else {
    }
    %c1_i32 = arith.constant 1 : i32
    %3 = arith.cmpi eq, %arg0, %c1_i32 : i32
    %4 = arith.extui %3 : i1 to i32
    %c0_i32_1 = arith.constant 0 : i32
    %5 = arith.cmpi ne, %4, %c0_i32_1 : i32
    scf.if %5 {
      %c0_i32_2 = arith.constant 0 : i32
      %6 = arith.cmpi eq, %arg1, %c0_i32_2 : i32
      %7 = arith.extui %6 : i1 to i32
      %c0_i32_3 = arith.constant 0 : i32
      %8 = arith.cmpi ne, %7, %c0_i32_3 : i32
      scf.if %8 {
        %c0_22 = arith.constant 0 : index
        %c0_23 = arith.constant 0 : index
        %38 = vector.load %arg13[%c0_22, %c0_23] : memref<1x128xf32, #tpu.memory_space<vmem>>, vector<1x128xf32>
        %cst_24 = arith.constant 0.0333333351 : f32
        %39 = vector.broadcast %cst_24 : f32 to vector<1x128xf32>
        %40 = arith.mulf %38, %39 : vector<1x128xf32>
        %c0_25 = arith.constant 0 : index
        %c0_26 = arith.constant 0 : index
        %41 = vector.load %arg14[%c0_25, %c0_26] : memref<1x128xf32, #tpu.memory_space<vmem>>, vector<1x128xf32>
        %cst_27 = arith.constant 0.0333333351 : f32
        %42 = vector.broadcast %cst_27 : f32 to vector<1x128xf32>
        %43 = arith.mulf %41, %42 : vector<1x128xf32>
        %44 = arith.mulf %40, %40 : vector<1x128xf32>
        %45 = arith.subf %43, %44 : vector<1x128xf32>
        %c0_28 = arith.constant 0 : index
        %c0_29 = arith.constant 0 : index
        %46 = vector.load %arg5[%c0_28, %c0_29] : memref<1x128xf32, #tpu.memory_space<vmem>>, vector<1x128xf32>
        %cst_30 = arith.constant 9.99999974E-6 : f32
        %47 = vector.broadcast %cst_30 : f32 to vector<1x128xf32>
        %48 = arith.addf %45, %47 : vector<1x128xf32>
        %49 = math.rsqrt %48 : vector<1x128xf32>
        %50 = arith.mulf %46, %49 : vector<1x128xf32>
        %c0_31 = arith.constant 0 : index
        %c0_32 = arith.constant 0 : index
        %51 = vector.load %arg15[%c0_31, %c0_32] : memref<1x128xf32, #tpu.memory_space<vmem>>, vector<1x128xf32>
        tpu.vector_store %arg15[%c0_31, %c0_32], %50 {strides = array<i32>} : memref<1x128xf32, #tpu.memory_space<vmem>>, vector<1x128xf32>,
        %c0_33 = arith.constant 0 : index
        %c0_34 = arith.constant 0 : index
        %52 = vector.load %arg6[%c0_33, %c0_34] : memref<1x128xf32, #tpu.memory_space<vmem>>, vector<1x128xf32>
        %53 = arith.mulf %40, %50 : vector<1x128xf32>
        %54 = arith.subf %52, %53 : vector<1x128xf32>
        %c0_35 = arith.constant 0 : index
        %c0_36 = arith.constant 0 : index
        %55 = vector.load %arg16[%c0_35, %c0_36] : memref<1x128xf32, #tpu.memory_space<vmem>>, vector<1x128xf32>
        tpu.vector_store %arg16[%c0_35, %c0_36], %54 {strides = array<i32>} : memref<1x128xf32, #tpu.memory_space<vmem>>, vector<1x128xf32>,
      } else {
      }
      %9 = arith.index_cast %arg1 : i32 to index
      %c0 = arith.constant 0 : index
      %c0_4 = arith.constant 0 : index
      %10 = vector.load %arg12[%9, %c0, %c0_4] : memref<2x16x128xf32, #tpu.memory_space<vmem>>, vector<1x16x128xf32>
      %11 = vector.shape_cast %10 : vector<1x16x128xf32> to vector<16x128xf32>
      %c0_5 = arith.constant 0 : index
      %c0_6 = arith.constant 0 : index
      %12 = vector.load %arg15[%c0_5, %c0_6] : memref<1x128xf32, #tpu.memory_space<vmem>>, vector<1x128xf32>
      %13 = vector.broadcast %12 : vector<1x128xf32> to vector<16x128xf32>
      %14 = arith.mulf %11, %13 : vector<16x128xf32>
      %c0_7 = arith.constant 0 : index
      %c0_8 = arith.constant 0 : index
      %15 = vector.load %arg16[%c0_7, %c0_8] : memref<1x128xf32, #tpu.memory_space<vmem>>, vector<1x128xf32>
      %16 = vector.broadcast %15 : vector<1x128xf32> to vector<16x128xf32>
      %17 = arith.addf %14, %16 : vector<16x128xf32>
      %c0_9 = arith.constant 0 : index
      %c0_10 = arith.constant 0 : index
      %18 = vector.load %arg9[%c0_9, %c0_10] : memref<16x128xf32, #tpu.memory_space<vmem>>, vector<16x128xf32>
      tpu.vector_store %arg9[%c0_9, %c0_10], %17 {strides = array<i32>} : memref<16x128xf32, #tpu.memory_space<vmem>>, vector<16x128xf32>,
      %19 = arith.truncf %17 : vector<16x128xf32> to vector<16x128xbf16>
      %c0_11 = arith.constant 0 : index
      %c0_12 = arith.constant 0 : index
      %20 = vector.load %arg7[%c0_11, %c0_12] : memref<128x128xbf16, #tpu.memory_space<vmem>>, vector<128x128xbf16>
      %cst = arith.constant dense<0.000000e+00> : vector<16x128xf32>
      %21 = tpu.matmul %19, %20, %cst {dimension_numbers = #tpu.dot_dimension_numbers<[1], [0], [0], [1], [0, 0, 1, 1], [], []>} : vector<16x128xbf16>, vector<128x128xbf16>, vector<16x128xf32> -> vector<16x128xf32>
      %c0_13 = arith.constant 0 : index
      %c0_14 = arith.constant 0 : index
      %22 = vector.load %arg8[%c0_13, %c0_14] : memref<1x128xf32, #tpu.memory_space<vmem>>, vector<1x128xf32>
      %23 = vector.broadcast %22 : vector<1x128xf32> to vector<16x128xf32>
      %24 = arith.addf %21, %23 : vector<16x128xf32>
      %c0_15 = arith.constant 0 : index
      %c0_16 = arith.constant 0 : index
      %25 = vector.load %arg10[%c0_15, %c0_16] : memref<16x128xf32, #tpu.memory_space<vmem>>, vector<16x128xf32>
      tpu.vector_store %arg10[%c0_15, %c0_16], %24 {strides = array<i32>} : memref<16x128xf32, #tpu.memory_space<vmem>>, vector<16x128xf32>,
      %cst_17 = arith.constant dense<0xFF800000> : vector<16xf32>
      %26 = vector.multi_reduction <maximumf>, %24, %cst_17 [1] : vector<16x128xf32> to vector<16xf32>
      %27 = vector.shape_cast %26 : vector<16xf32> to vector<16x1xf32>
      %28 = vector.broadcast %27 : vector<16x1xf32> to vector<16x128xf32>
      %29 = arith.subf %24, %28 : vector<16x128xf32>
      %30 = math.exp %29 : vector<16x128xf32>
      %cst_18 = arith.constant dense<0.000000e+00> : vector<16xf32>
      %31 = vector.multi_reduction <add>, %30, %cst_18 [1] : vector<16x128xf32> to vector<16xf32>
      %32 = vector.shape_cast %31 : vector<16xf32> to vector<16x1xf32>
      %cst_19 = arith.constant 1.000000e+00 : f32
      %33 = vector.broadcast %cst_19 : f32 to vector<16x1xf32>
      %34 = arith.divf %33, %32 : vector<16x1xf32>
      %35 = vector.broadcast %34 : vector<16x1xf32> to vector<16x128xf32>
      %36 = arith.mulf %30, %35 : vector<16x128xf32>
      %c0_20 = arith.constant 0 : index
      %c0_21 = arith.constant 0 : index
      %37 = vector.load %arg11[%c0_20, %c0_21] : memref<16x128xf32, #tpu.memory_space<vmem>>, vector<16x128xf32>
      tpu.vector_store %arg11[%c0_20, %c0_21], %36 {strides = array<i32>} : memref<16x128xf32, #tpu.memory_space<vmem>>, vector<16x128xf32>,
    } else {
    }
    return
  }
  func.func @transform_0(%arg0: i32, %arg1: i32) -> (i32, i32) {
    %c1_i32 = arith.constant 1 : i32
    %0 = arith.subi %c1_i32, %arg0 : i32
    %1 = arith.muli %0, %arg1 : i32
    %c0_i32 = arith.constant 0 : i32
    %c0_i32_0 = arith.constant 0 : i32
    return %1, %c0_i32 : i32, i32
  }
  func.func @transform_1(%arg0: i32, %arg1: i32) -> (i32, i32) {
    %c0_i32 = arith.constant 0 : i32
    %c0_i32_0 = arith.constant 0 : i32
    %c0_i32_1 = arith.constant 0 : i32
    return %c0_i32, %c0_i32_0 : i32, i32
  }
  func.func @transform_2(%arg0: i32, %arg1: i32) -> (i32, i32) {
    %c0_i32 = arith.constant 0 : i32
    %c0_i32_0 = arith.constant 0 : i32
    %c0_i32_1 = arith.constant 0 : i32
    return %c0_i32, %c0_i32_0 : i32, i32
  }
  func.func @transform_3(%arg0: i32, %arg1: i32) -> (i32, i32) {
    %c0_i32 = arith.constant 0 : i32
    %c0_i32_0 = arith.constant 0 : i32
    %c0_i32_1 = arith.constant 0 : i32
    return %c0_i32, %c0_i32_0 : i32, i32
  }
  func.func @transform_4(%arg0: i32, %arg1: i32) -> (i32, i32) {
    %c0_i32 = arith.constant 0 : i32
    %c0_i32_0 = arith.constant 0 : i32
    %c0_i32_1 = arith.constant 0 : i32
    return %c0_i32, %c0_i32_0 : i32, i32
  }
  func.func @transform_5(%arg0: i32, %arg1: i32) -> (i32, i32) {
    %c0_i32 = arith.constant 0 : i32
    %c0_i32_0 = arith.constant 0 : i32
    %c0_i32_1 = arith.constant 0 : i32
    return %c0_i32, %c0_i32_0 : i32, i32
  }
  func.func @transform_6(%arg0: i32, %arg1: i32) -> (i32, i32) {
    %c0_i32 = arith.constant 0 : i32
    %c0_i32_0 = arith.constant 0 : i32
    %c0_i32_1 = arith.constant 0 : i32
    return %c0_i32, %c0_i32_0 : i32, i32
  }
  func.func @transform_7(%arg0: i32, %arg1: i32) -> (i32, i32) {
    %0 = arith.muli %arg0, %arg1 : i32
    %c0_i32 = arith.constant 0 : i32
    %c0_i32_0 = arith.constant 0 : i32
    return %0, %c0_i32 : i32, i32
  }
  func.func @transform_8(%arg0: i32, %arg1: i32) -> (i32, i32) {
    %0 = arith.muli %arg0, %arg1 : i32
    %c0_i32 = arith.constant 0 : i32
    %c0_i32_0 = arith.constant 0 : i32
    return %0, %c0_i32 : i32, i32
  }
  func.func @transform_9(%arg0: i32, %arg1: i32) -> (i32, i32) {
    %0 = arith.muli %arg0, %arg1 : i32
    %c0_i32 = arith.constant 0 : i32
    %c0_i32_0 = arith.constant 0 : i32
    return %0, %c0_i32 : i32, i32
  }
}

</mosaic_0001>

<llo_original>
// kernel: cls_forward.1
$region0: #{cls_forward.1}
  #allocation0 [shape = 'u32[]', space=smem, size = 0x4, offset = 0x4, fixed_abs, tag = 'smem constant byte address 0x4 - core index']
  #allocation1 [shape = 'u32[72,128]{1,0:T(1,128)}', space=vmem, size = 0x9000, scoped, tag = 'internal scratch']
  #allocation2 [shape = 'f32[2,16,128]{2,1,0:T(8,128)}', space=vmem, size = 0x4000, scoped, tag = 'scratch operand']
  #allocation3 [shape = 'f32[1,128]{1,0:T(1,128)}', space=vmem, size = 0x200, scoped, tag = 'scratch operand']
  #allocation4 [shape = 'f32[1,128]{1,0:T(1,128)}', space=vmem, size = 0x200, scoped, tag = 'scratch operand']
  #allocation5 [shape = 'f32[1,128]{1,0:T(1,128)}', space=vmem, size = 0x200, scoped, tag = 'scratch operand']
  #allocation6 [shape = 'f32[1,128]{1,0:T(1,128)}', space=vmem, size = 0x200, scoped, tag = 'scratch operand']
  %s0 = inlined_call_operand.vmem [shape: bf16[32,128], index: 0, kind: input, shape index: {}]
  %s1 = inlined_call_operand.vmem [shape: bf16[128,128], index: 1, kind: input, shape index: {}]
  %s2 = inlined_call_operand.vmem [shape: f32[1,128], index: 2, kind: input, shape index: {}]
  %s3 = inlined_call_operand.vmem [shape: f32[1,128], index: 3, kind: input, shape index: {}]
  %s4 = inlined_call_operand.vmem [shape: f32[1,128], index: 4, kind: input, shape index: {}]
  %s5 = inlined_call_operand.vmem [shape: bf16[128,128], index: 5, kind: input, shape index: {}]
  %s6 = inlined_call_operand.vmem [shape: f32[1,128], index: 6, kind: input, shape index: {}]
  %s7 = inlined_call_operand.hbm [shape: f32[32,128], index: 7, kind: output, shape index: {0}]
  %s8 = inlined_call_operand.vmem [shape: f32[32,128], index: 8, kind: output, shape index: {1}]
  %s9 = inlined_call_operand.vmem [shape: f32[32,128], index: 9, kind: output, shape index: {2}]
  %10 = xla_tuple %s7, %s8, %s9
  %s11 = sld [smem:[#allocation0]]
  $region93: #{cls_forward.1} parent=0
    _
  %s13 = ssub.s32 1, %s11
  %s14 = scalar_select 0, %s13, %s11
  $region1: #{cls_forward.1} parent=0
    #allocation7 [shape = 'u8[16384]{0}', space=vmem, size = 0x4000, scoped, tag = 'output window, operand 0']
    #allocation8 [shape = 's32[2]{0}', space=sflag, size = 0x8, scoped, tag = 'scoped memory for cls_forward.1']
    %15 = vsyncpa [#allocation8], 0
    %s16 = scalar_lea.sflag [#allocation8], 1
    %17 = vsyncpa %s16, 0
    loop: start=0, step=1, limit=6
    $region2: #{cls_forward.1} parent=1 // loop_pre_header
      _
    $region3: #{cls_forward.1} parent=1 // loop_header
      %s19 = sphi 0, %s23
      %p20 = scmp.ge.s32.totalorder %s19, 6
      %s26 = sphi 0, %s38
      %s27 = sphi 0, %s34
      %s28 = sphi 0, %s26
      %s29 = sphi 0, %s27
      %s30 = sphi 0, %s28
      %s31 = sphi 0, %s29
      %s45 = sphi 0, %s47
      %s48 = sphi 0, %s45
      %s49 = sphi 0, %s48
      %s65 = sphi 0, %s49
      %s69 = sphi 0, %s69
      %s71 = sphi 0, %s69
      %s72 = sphi 0, %s71
      %s86 = sphi 0, %s72
      %s90 = sphi 0, %s90
      %s92 = sphi 0, %s90
      %s93 = sphi 0, %s92
      %s107 = sphi 0, %s93
      %s111 = sphi 0, %s111
      %s113 = sphi 0, %s111
      %s114 = sphi 0, %s113
      %s128 = sphi 0, %s114
      %s132 = sphi 0, %s132
      %s134 = sphi 0, %s132
      %s135 = sphi 0, %s134
      %s149 = sphi 0, %s135
      %s153 = sphi 0, %s153
      %s155 = sphi 0, %s153
      %s156 = sphi 0, %s155
      %s170 = sphi 0, %s156
      %s174 = sphi 0, %s174
      %s176 = sphi 0, %s174
      %s177 = sphi 0, %s176
      %s191 = sphi 0, %s177
      %s199 = sphi 0, %s201
      %s202 = sphi 0, %s199
      %s203 = sphi 0, %s202
      %s219 = sphi 0, %s203
      %s227 = sphi 0, %s229
      %s230 = sphi 0, %s227
      %s231 = sphi 0, %s230
      %s247 = sphi 0, %s231
      %s255 = sphi 0, %s257
      %s258 = sphi 0, %s255
      %s259 = sphi 0, %s258
      %s275 = sphi 0, %s259
    $region4: #{cls_forward.1} parent=1 // loop_header_branch
      %22 = sbr.rel (%p20) target = $region8
    $region5: #{cls_forward.1} parent=1 // loop_body
      %s24 = ssub.s32 %s19, 1
      %s25 = ssub.s32 %s19, 2
      %s32 = sadd.s32 1, %s27
      %p33 = scmp.ge.s32.totalorder %s32, 2
      %s34 = scalar_select %p33, 0, %s32
      %s35 = sadd.s32 1, %s26
      %s36 = scalar_select %p33, %s35, %s26
      %p37 = scmp.ge.s32.totalorder %s36, 2
      %s38 = scalar_select %p37, 0, %s36
      %s39 = ssub.s32 1, %s26
      %s40 = smul.u32 %s39, %s27
      %s41 = ssub.s32 1, %s38
      %s42 = smul.u32 %s41, %s34
      %s43 = ssub.s32 %s40, %s42
      %p44 = scmp.eq.s32.totalorder %s43, 0
      %s46 = sadd.s32 %s45, 1
      %s47 = scalar_select %p44, %s45, %s46
      %p50 = pneg %p44
      %p51 = scmp.eq.s32.totalorder %s19, 3
      %p52 = por %p50, %p51
      %p53 = scmp.ne.s32.totalorder %s45, %s48
      %p54 = scmp.eq.s32.totalorder %s19, 0
      %p55 = por %p53, %p54
      %p56 = scmp.ne.s32.totalorder %s45, %s48
      %p57 = scmp.eq.s32.totalorder %s24, 3
      %p58 = por %p56, %p57
      %p59 = scmp.ne.s32.totalorder %s48, %s49
      %p60 = scmp.eq.s32.totalorder %s24, 0
      %p61 = por %p59, %p60
      %p62 = scmp.ne.s32.totalorder %s48, %s49
      %p63 = scmp.eq.s32.totalorder %s25, 3
      %p64 = por %p62, %p63
      %p66 = scmp.ne.s32.totalorder %s49, %s65
      %p67 = scmp.eq.s32.totalorder %s25, 0
      %p68 = por %p66, %p67
      %s70 = sadd.s32 %s69, 1
      %p73 = scmp.eq.s32.totalorder %s19, 3
      %p74 = scmp.ne.s32.totalorder %s69, %s71
      %p75 = scmp.eq.s32.totalorder %s19, 0
      %p76 = por %p74, %p75
      %p77 = scmp.ne.s32.totalorder %s69, %s71
      %p78 = scmp.eq.s32.totalorder %s24, 3
      %p79 = por %p77, %p78
      %p80 = scmp.ne.s32.totalorder %s71, %s72
      %p81 = scmp.eq.s32.totalorder %s24, 0
      %p82 = por %p80, %p81
      %p83 = scmp.ne.s32.totalorder %s71, %s72
      %p84 = scmp.eq.s32.totalorder %s25, 3
      %p85 = por %p83, %p84
      %p87 = scmp.ne.s32.totalorder %s72, %s86
      %p88 = scmp.eq.s32.totalorder %s25, 0
      %p89 = por %p87, %p88
      %s91 = sadd.s32 %s90, 1
      %p94 = scmp.eq.s32.totalorder %s19, 3
      %p95 = scmp.ne.s32.totalorder %s90, %s92
      %p96 = scmp.eq.s32.totalorder %s19, 0
      %p97 = por %p95, %p96
      %p98 = scmp.ne.s32.totalorder %s90, %s92
      %p99 = scmp.eq.s32.totalorder %s24, 3
      %p100 = por %p98, %p99
      %p101 = scmp.ne.s32.totalorder %s92, %s93
      %p102 = scmp.eq.s32.totalorder %s24, 0
      %p103 = por %p101, %p102
      %p104 = scmp.ne.s32.totalorder %s92, %s93
      %p105 = scmp.eq.s32.totalorder %s25, 3
      %p106 = por %p104, %p105
      %p108 = scmp.ne.s32.totalorder %s93, %s107
      %p109 = scmp.eq.s32.totalorder %s25, 0
      %p110 = por %p108, %p109
      %s112 = sadd.s32 %s111, 1
      %p115 = scmp.eq.s32.totalorder %s19, 3
      %p116 = scmp.ne.s32.totalorder %s111, %s113
      %p117 = scmp.eq.s32.totalorder %s19, 0
      %p118 = por %p116, %p117
      %p119 = scmp.ne.s32.totalorder %s111, %s113
      %p120 = scmp.eq.s32.totalorder %s24, 3
      %p121 = por %p119, %p120
      %p122 = scmp.ne.s32.totalorder %s113, %s114
      %p123 = scmp.eq.s32.totalorder %s24, 0
      %p124 = por %p122, %p123
      %p125 = scmp.ne.s32.totalorder %s113, %s114
      %p126 = scmp.eq.s32.totalorder %s25, 3
      %p127 = por %p125, %p126
      %p129 = scmp.ne.s32.totalorder %s114, %s128
      %p130 = scmp.eq.s32.totalorder %s25, 0
      %p131 = por %p129, %p130
      %s133 = sadd.s32 %s132, 1
      %p136 = scmp.eq.s32.totalorder %s19, 3
      %p137 = scmp.ne.s32.totalorder %s132, %s134
      %p138 = scmp.eq.s32.totalorder %s19, 0
      %p139 = por %p137, %p138
      %p140 = scmp.ne.s32.totalorder %s132, %s134
      %p141 = scmp.eq.s32.totalorder %s24, 3
      %p142 = por %p140, %p141
      %p143 = scmp.ne.s32.totalorder %s134, %s135
      %p144 = scmp.eq.s32.totalorder %s24, 0
      %p145 = por %p143, %p144
      %p146 = scmp.ne.s32.totalorder %s134, %s135
      %p147 = scmp.eq.s32.totalorder %s25, 3
      %p148 = por %p146, %p147
      %p150 = scmp.ne.s32.totalorder %s135, %s149
      %p151 = scmp.eq.s32.totalorder %s25, 0
      %p152 = por %p150, %p151
      %s154 = sadd.s32 %s153, 1
      %p157 = scmp.eq.s32.totalorder %s19, 3
      %p158 = scmp.ne.s32.totalorder %s153, %s155
      %p159 = scmp.eq.s32.totalorder %s19, 0
      %p160 = por %p158, %p159
      %p161 = scmp.ne.s32.totalorder %s153, %s155
      %p162 = scmp.eq.s32.totalorder %s24, 3
      %p163 = por %p161, %p162
      %p164 = scmp.ne.s32.totalorder %s155, %s156
      %p165 = scmp.eq.s32.totalorder %s24, 0
      %p166 = por %p164, %p165
      %p167 = scmp.ne.s32.totalorder %s155, %s156
      %p168 = scmp.eq.s32.totalorder %s25, 3
      %p169 = por %p167, %p168
      %p171 = scmp.ne.s32.totalorder %s156, %s170
      %p172 = scmp.eq.s32.totalorder %s25, 0
      %p173 = por %p171, %p172
      %s175 = sadd.s32 %s174, 1
      %p178 = scmp.eq.s32.totalorder %s19, 3
      %p179 = scmp.ne.s32.totalorder %s174, %s176
      %p180 = scmp.eq.s32.totalorder %s19, 0
      %p181 = por %p179, %p180
      %p182 = scmp.ne.s32.totalorder %s174, %s176
      %p183 = scmp.eq.s32.totalorder %s24, 3
      %p184 = por %p182, %p183
      %p185 = scmp.ne.s32.totalorder %s176, %s177
      %p186 = scmp.eq.s32.totalorder %s24, 0
      %p187 = por %p185, %p186
      %p188 = scmp.ne.s32.totalorder %s176, %s177
      %p189 = scmp.eq.s32.totalorder %s25, 3
      %p190 = por %p188, %p189
      %p192 = scmp.ne.s32.totalorder %s177, %s191
      %p193 = scmp.eq.s32.totalorder %s25, 0
      %p194 = por %p192, %p193
      %s195 = smul.u32 %s26, %s27
      %s196 = smul.u32 %s38, %s34
      %s197 = ssub.s32 %s195, %s196
      %p198 = scmp.eq.s32.totalorder %s197, 0
      %s200 = sadd.s32 %s199, 1
      %s201 = scalar_select %p198, %s199, %s200
      %p204 = pneg %p198
      %p205 = scmp.eq.s32.totalorder %s19, 3
      %p206 = por %p204, %p205
      %p207 = scmp.ne.s32.totalorder %s199, %s202
      %p208 = scmp.eq.s32.totalorder %s19, 0
      %p209 = por %p207, %p208
      %p210 = scmp.ne.s32.totalorder %s199, %s202
      %p211 = scmp.eq.s32.totalorder %s24, 3
      %p212 = por %p210, %p211
      %p213 = scmp.ne.s32.totalorder %s202, %s203
      %p214 = scmp.eq.s32.totalorder %s24, 0
      %p215 = por %p213, %p214
      %p216 = scmp.ne.s32.totalorder %s202, %s203
      %p217 = scmp.eq.s32.totalorder %s25, 3
      %p218 = por %p216, %p217
      %p220 = scmp.ne.s32.totalorder %s203, %s219
      %p221 = scmp.eq.s32.totalorder %s25, 0
      %p222 = por %p220, %p221
      %s223 = smul.u32 %s26, %s27
      %s224 = smul.u32 %s38, %s34
      %s225 = ssub.s32 %s223, %s224
      %p226 = scmp.eq.s32.totalorder %s225, 0
      %s228 = sadd.s32 %s227, 1
      %s229 = scalar_select %p226, %s227, %s228
      %p232 = pneg %p226
      %p233 = scmp.eq.s32.totalorder %s19, 3
      %p234 = por %p232, %p233
      %p235 = scmp.ne.s32.totalorder %s227, %s230
      %p236 = scmp.eq.s32.totalorder %s19, 0
      %p237 = por %p235, %p236
      %p238 = scmp.ne.s32.totalorder %s227, %s230
      %p239 = scmp.eq.s32.totalorder %s24, 3
      %p240 = por %p238, %p239
      %p241 = scmp.ne.s32.totalorder %s230, %s231
      %p242 = scmp.eq.s32.totalorder %s24, 0
      %p243 = por %p241, %p242
      %p244 = scmp.ne.s32.totalorder %s230, %s231
      %p245 = scmp.eq.s32.totalorder %s25, 3
      %p246 = por %p244, %p245
      %p248 = scmp.ne.s32.totalorder %s231, %s247
      %p249 = scmp.eq.s32.totalorder %s25, 0
      %p250 = por %p248, %p249
      %s251 = smul.u32 %s26, %s27
      %s252 = smul.u32 %s38, %s34
      %s253 = ssub.s32 %s251, %s252
      %p254 = scmp.eq.s32.totalorder %s253, 0
      %s256 = sadd.s32 %s255, 1
      %s257 = scalar_select %p254, %s255, %s256
      %p260 = pneg %p254
      %p261 = scmp.eq.s32.totalorder %s19, 3
      %p262 = por %p260, %p261
      %p263 = scmp.ne.s32.totalorder %s255, %s258
      %p264 = scmp.eq.s32.totalorder %s19, 0
      %p265 = por %p263, %p264
      %p266 = scmp.ne.s32.totalorder %s255, %s258
      %p267 = scmp.eq.s32.totalorder %s24, 3
      %p268 = por %p266, %p267
      %p269 = scmp.ne.s32.totalorder %s258, %s259
      %p270 = scmp.eq.s32.totalorder %s24, 0
      %p271 = por %p269, %p270
      %p272 = scmp.ne.s32.totalorder %s258, %s259
      %p273 = scmp.eq.s32.totalorder %s25, 3
      %p274 = por %p272, %p273
      %p276 = scmp.ne.s32.totalorder %s259, %s275
      %p277 = scmp.eq.s32.totalorder %s25, 0
      %p278 = por %p276, %p277
      %p279 = scmp.le.s32.totalorder 1, %s19
      %p280 = scmp.lt.s32.totalorder %s19, 5
      %p281 = pnand %p279, %p280
      %p282 = pneg %p281
      // Predicated region
      $region9: #{cls_forward.1} parent=5 // pred_check
        _
      $region10: #{cls_forward.1} parent=5 // pred_check_branch
        %284 = sbr.rel (%p281) target = $region12
      $region11: #{cls_forward.1} parent=5 // pred_region
        %s285 = ssub.s32 %s19, 1
        // Predicated region
        $region13: #{cls_forward.1} parent=11 // pred_check
          %p286 = pneg %p82
        $region14: #{cls_forward.1} parent=11 // pred_check_branch
          %288 = sbr.rel (%p286) target = $region16
        $region15: #{cls_forward.1} parent=11 // pred_region
          _
        $region16: #{cls_forward.1} parent=11 // pred_fallthru
          _
        // Predicated region
        $region17: #{cls_forward.1} parent=11 // pred_check
          %p289 = pneg %p103
        $region18: #{cls_forward.1} parent=11 // pred_check_branch
          %291 = sbr.rel (%p289) target = $region20
        $region19: #{cls_forward.1} parent=11 // pred_region
          _
        $region20: #{cls_forward.1} parent=11 // pred_fallthru
          _
        // Predicated region
        $region21: #{cls_forward.1} parent=11 // pred_check
          %p292 = pneg %p124
        $region22: #{cls_forward.1} parent=11 // pred_check_branch
          %294 = sbr.rel (%p292) target = $region24
        $region23: #{cls_forward.1} parent=11 // pred_region
          _
        $region24: #{cls_forward.1} parent=11 // pred_fallthru
          _
        // Predicated region
        $region25: #{cls_forward.1} parent=11 // pred_check
          %p295 = pneg %p145
        $region26: #{cls_forward.1} parent=11 // pred_check_branch
          %297 = sbr.rel (%p295) target = $region28
        $region27: #{cls_forward.1} parent=11 // pred_region
          _
        $region28: #{cls_forward.1} parent=11 // pred_fallthru
          _
        // Predicated region
        $region29: #{cls_forward.1} parent=11 // pred_check
          %p298 = pneg %p166
        $region30: #{cls_forward.1} parent=11 // pred_check_branch
          %300 = sbr.rel (%p298) target = $region32
        $region31: #{cls_forward.1} parent=11 // pred_region
          _
        $region32: #{cls_forward.1} parent=11 // pred_fallthru
          _
        // Predicated region
        $region33: #{cls_forward.1} parent=11 // pred_check
          %p301 = pneg %p187
        $region34: #{cls_forward.1} parent=11 // pred_check_branch
          %303 = sbr.rel (%p301) target = $region36
        $region35: #{cls_forward.1} parent=11 // pred_region
          _
        $region36: #{cls_forward.1} parent=11 // pred_fallthru
          _
      $region12: #{cls_forward.1} parent=5 // pred_fallthru
        _
      %p304 = scmp.lt.s32.totalorder %s19, 4
      // Predicated region
      $region37: #{cls_forward.1} parent=5 // pred_check
        %p305 = pneg %p304
      $region38: #{cls_forward.1} parent=5 // pred_check_branch
        %307 = sbr.rel (%p305) target = $region40
      $region39: #{cls_forward.1} parent=5 // pred_region
        // Predicated region
        $region41: #{cls_forward.1} parent=39 // pred_check
          %p308 = pneg %p55
        $region42: #{cls_forward.1} parent=39 // pred_check_branch
          %310 = sbr.rel (%p308) target = $region44
        $region43: #{cls_forward.1} parent=39 // pred_region
          %s311 = ssub.s32 1, %s26
          %s312 = smul.u32 %s311, %s27
          %s313 = smul.u32 2, %s312
          %p314 = scmp.lt.s32.totalorder %s313, 3
          %s315 = scalar_select %p314, %s313, 3
          %s316 = smul.addr %s315, 4
          %s317 = scalar_lea.vmem %s0, %s316
          %s318 = ssub.s32 1, %s26
          %s319 = smul.u32 %s318, %s27
          %s320 = smul.u32 2, %s319
        $region44: #{cls_forward.1} parent=39 // pred_fallthru
          _
      $region40: #{cls_forward.1} parent=5 // pred_fallthru
        _
      %p321 = scmp.le.s32.totalorder 1, %s19
      %p322 = scmp.lt.s32.totalorder %s19, 5
      %p323 = pnand %p321, %p322
      %p324 = pneg %p323
      // Predicated region
      $region45: #{cls_forward.1} parent=5 // pred_check
        _
      $region46: #{cls_forward.1} parent=5 // pred_check_branch
        %326 = sbr.rel (%p323) target = $region48
      $region47: #{cls_forward.1} parent=5 // pred_region
        %s327 = ssub.s32 %s19, 1
        %s328 = ssub.s32 1, %s28
        %s329 = smul.u32 %s328, %s29
        %s330 = smul.u32 2, %s329
        %p331 = scmp.lt.s32.totalorder %s330, 3
        %s332 = scalar_select %p331, %s330, 3
        %s333 = smul.addr %s332, 4
        %s334 = scalar_lea.vmem %s0, %s333
        %p335 = pneg %p61
        %p336 = pneg %p58
        %p337 = pneg %p82
        %p338 = pneg %p79
        %p339 = pneg %p103
        %p340 = pneg %p100
        %p341 = pneg %p124
        %p342 = pneg %p121
        %p343 = pneg %p145
        %p344 = pneg %p142
        %p345 = pneg %p166
        %p346 = pneg %p163
        %p347 = pneg %p187
        %p348 = pneg %p184
        %p349 = pneg %p215
        %p350 = pneg %p212
        %s351 = sand.u32 %s202, 1
        %s352 = scalar_lea.sflag [#allocation8], %s351
        %s353 = sand.u32 %s202, 1
        %s354 = smul.addr %s353, 16
        %s355 = scalar_lea.vmem [#allocation7], %s354
        %p356 = pneg %p243
        %p357 = pneg %p240
        %s358 = smul.u32 %s28, %s29
        %s359 = smul.u32 2, %s358
        %p360 = scmp.lt.s32.totalorder %s359, 3
        %s361 = scalar_select %p360, %s359, 3
        %s362 = smul.addr %s361, 8
        %s363 = scalar_lea.vmem %s8, %s362
        %p364 = pneg %p271
        %p365 = pneg %p268
        %s366 = smul.u32 %s28, %s29
        %s367 = smul.u32 2, %s366
        %p368 = scmp.lt.s32.totalorder %s367, 3
        %s369 = scalar_select %p368, %s367, 3
        %s370 = smul.addr %s369, 8
        %s371 = scalar_lea.vmem %s9, %s370
        %s372 = ssub.s32 1, %s28
        %s373 = smul.u32 %s372, %s29
        %s374 = smul.u32 2, %s373
        %p375 = scmp.lt.s32.totalorder %s374, 3
        %s376 = scalar_select %p375, %s374, 3
        %s377 = smul.addr %s376, 4
        %s378 = scalar_lea.vmem %s0, %s377
        %s379 = ssub.s32 1, %s28
        %s380 = smul.u32 %s379, %s29
        %s381 = smul.u32 2, %s380
        %s382 = smul.u32 %s28, %s29
        %s383 = smul.u32 2, %s382
        %s384 = smul.u32 %s28, %s29
        %s385 = smul.u32 2, %s384
        %p386 = scmp.lt.s32.totalorder %s385, 3
        %s387 = scalar_select %p386, %s385, 3
        %s388 = smul.addr %s387, 8
        %s389 = scalar_lea.vmem %s8, %s388
        %s390 = smul.u32 %s28, %s29
        %s391 = smul.u32 2, %s390
        %s392 = smul.u32 %s28, %s29
        %s393 = smul.u32 2, %s392
        %p394 = scmp.lt.s32.totalorder %s393, 3
        %s395 = scalar_select %p394, %s393, 3
        %s396 = smul.addr %s395, 8
        %s397 = scalar_lea.vmem %s9, %s396
        %s398 = smul.u32 %s28, %s29
        %s399 = smul.u32 2, %s398
        %p400 = scmp.eq.s32.totalorder %s28, 0
        // Predicated region
        $region49: #{cls_forward.1} parent=47 // pred_check
          %p401 = pneg %p400
        $region50: #{cls_forward.1} parent=47 // pred_check_branch
          %403 = sbr.rel (%p401) target = $region52
        $region51: #{cls_forward.1} parent=47 // pred_region
          %p404 = scmp.eq.s32.totalorder %s29, 0
          // Predicated region
          $region53: #{cls_forward.1} parent=51 // pred_check
            %p405 = pneg %p404
          $region54: #{cls_forward.1} parent=51 // pred_check_branch
            %407 = sbr.rel (%p405) target = $region56
          $region55: #{cls_forward.1} parent=51 // pred_region
            %408 = vst [vmem:[#allocation3] sm:$0x1] 0.0
            %409 = vst [vmem:[#allocation4] sm:$0x1] 0.0
          $region56: #{cls_forward.1} parent=51 // pred_fallthru
            _
          %v410 = vld [vmem:[%s378] sm:$0xf]
          %v411 = vld [vmem:[%s378 + $0x4] sm:$0xf]
          %v412 = vld [vmem:[%s1] sm:$0xf]
          %v413 = vld [vmem:[%s1 + $0x4] sm:$0xf]
          %v414 = vld [vmem:[%s1 + $0x8] sm:$0xf]
          %v415 = vld [vmem:[%s1 + $0xc] sm:$0xf]
          %v416 = vld [vmem:[%s1 + $0x10] sm:$0xf]
          %v417 = vld [vmem:[%s1 + $0x14] sm:$0xf]
          %v418 = vld [vmem:[%s1 + $0x18] sm:$0xf]
          %v419 = vld [vmem:[%s1 + $0x1c] sm:$0xf]
          %v420 = vld [vmem:[%s1 + $0x20] sm:$0xf]
          %v421 = vld [vmem:[%s1 + $0x24] sm:$0xf]
          %v422 = vld [vmem:[%s1 + $0x28] sm:$0xf]
          %v423 = vld [vmem:[%s1 + $0x2c] sm:$0xf]
          %v424 = vld [vmem:[%s1 + $0x30] sm:$0xf]
          %v425 = vld [vmem:[%s1 + $0x34] sm:$0xf]
          %v426 = vld [vmem:[%s1 + $0x38] sm:$0xf]
          %v427 = vld [vmem:[%s1 + $0x3c] sm:$0xf]
          %v428 = vld [vmem:[%s2] sm:$0x1]
          %v430 = vperm.slane %v428, 0
          %v434 = vunpack.c.l.b16 %v410
          %v435 = vunpack.c.l.b16 %v411
          %v436 = vpack.c.b16 %v435, %v434
          %v454 = vunpack.c.l.b16 %v412
          %v455 = vunpack.c.l.b16 %v413
          %v456 = vunpack.c.l.b16 %v414
          %v457 = vunpack.c.l.b16 %v415
          %v458 = vunpack.c.l.b16 %v416
          %v459 = vunpack.c.l.b16 %v417
          %v460 = vunpack.c.l.b16 %v418
          %v461 = vunpack.c.l.b16 %v419
          %v462 = vunpack.c.l.b16 %v420
          %v463 = vunpack.c.l.b16 %v421
          %v464 = vunpack.c.l.b16 %v422
          %v465 = vunpack.c.l.b16 %v423
          %v466 = vunpack.c.l.b16 %v424
          %v467 = vunpack.c.l.b16 %v425
          %v468 = vunpack.c.l.b16 %v426
          %v469 = vunpack.c.l.b16 %v427
          %v470 = vpack.c.b16 %v455, %v454
          %v471 = vpack.c.b16 %v457, %v456
          %v472 = vpack.c.b16 %v459, %v458
          %v473 = vpack.c.b16 %v461, %v460
          %v474 = vpack.c.b16 %v463, %v462
          %v475 = vpack.c.b16 %v465, %v464
          %v476 = vpack.c.b16 %v467, %v466
          %v477 = vpack.c.b16 %v469, %v468
          %486 = vmatpush.bf16.msra.mxu0 %v477
          %487 = vmatpush.bf16.msra.mxu0 %v476
          %488 = vmatpush.bf16.msra.mxu0 %v475
          %489 = vmatpush.bf16.msra.mxu0 %v474
          %490 = vmatpush.bf16.msra.mxu0 %v473
          %491 = vmatpush.bf16.msra.mxu0 %v472
          %492 = vmatpush.bf16.msra.mxu0 %v471
          %493 = vmatpush.bf16.msra.mxu0 %v470
          %494 = vmatmul.bf16.gmra.mxu0 %v436
          %v495 = vpop.f32.mrf.mxu0
          %v496 = vadd.f32 %v430, %v495
          %v497 = vpop.f32.mrf.mxu0
          %v498 = vadd.f32 %v430, %v497
          %499 = vdwg.mxu0
          %s500 = smul.u32 %s29, 16
          %s501 = scalar_lea.vmem [#allocation2], %s500
          %502 = vst [vmem:[%s501] sm:$0xff] %v496
          %503 = vst [vmem:[%s501 + $0x8] sm:$0xff] %v498
          %v504 = vlaneseq
          %v505 = vshrl.u32 %v504, 7
          %v506 = vadd.s32 %v505, 8
          %v507 = vstv %s500
          %v508 = vadd.s32 %v507, %v505
          %v509 = vadd.s32 %v507, %v506
          %vm510 = vcmp.lt.s32.totalorder %v508, 30
          %vm511 = vcmp.lt.s32.totalorder %v509, 30
          %v512 = vsel %vm510, %v496, 0.0
          %v513 = vsel %vm511, %v498, 0.0
          %v514 = vld [vmem:[#allocation3] sm:$0x1]
          %v515 = vadd.f32 %v512, %v513
          %v516 = vrot.slane %v515, 4
          %v517 = vadd.f32 %v515, %v516
          %v518 = vrot.slane %v517, 2
          %v519 = vadd.f32 %v517, %v518
          %v520 = vrot.slane %v519, 1
          %v521 = vadd.f32 %v519, %v520
          %v522 = vadd.f32 %v514, %v521
          %523 = vst [vmem:[#allocation3] sm:$0x1] %v522
          %v524 = vld [vmem:[#allocation4] sm:$0x1]
          %v525 = vmul.f32 %v512, %v496
          %v526 = vmul.f32 %v513, %v498
          %v527 = vadd.f32 %v525, %v526
          %v528 = vrot.slane %v527, 4
          %v529 = vadd.f32 %v527, %v528
          %v530 = vrot.slane %v529, 2
          %v531 = vadd.f32 %v529, %v530
          %v532 = vrot.slane %v531, 1
          %v533 = vadd.f32 %v531, %v532
          %v534 = vadd.f32 %v524, %v533
          %535 = vst [vmem:[#allocation4] sm:$0x1] %v534
        $region52: #{cls_forward.1} parent=47 // pred_fallthru
          _
        %p536 = scmp.eq.s32.totalorder %s28, 1
        // Predicated region
        $region57: #{cls_forward.1} parent=47 // pred_check
          %p537 = pneg %p536
        $region58: #{cls_forward.1} parent=47 // pred_check_branch
          %539 = sbr.rel (%p537) target = $region60
        $region59: #{cls_forward.1} parent=47 // pred_region
          %p540 = scmp.eq.s32.totalorder %s29, 0
          // Predicated region
          $region61: #{cls_forward.1} parent=59 // pred_check
            %p541 = pneg %p540
          $region62: #{cls_forward.1} parent=59 // pred_check_branch
            %543 = sbr.rel (%p541) target = $region64
          $region63: #{cls_forward.1} parent=59 // pred_region
            %v544 = vld [vmem:[#allocation3] sm:$0x1]
            %v545 = vmul.f32 %v544, 0.033333335
            %v546 = vld [vmem:[#allocation4] sm:$0x1]
            %v547 = vmul.f32 %v546, 0.033333335
            %v548 = vmul.f32 %v545, %v545
            %v549 = vsub.f32 %v547, %v548
            %v550 = vld [vmem:[%s3] sm:$0x1]
            %v551 = vadd.f32 %v549, 1e-05
            %v552 = vrsqrt.pop %v551
            %v553 = vmul.f32 %v552, %v551
            %v554 = vmul.f32 %v553, %v552
            %v555 = vmul.f32 0.5, %v554
            %v556 = vsub.f32 1.5, %v555
            %v557 = vmul.f32 %v552, %v556
            %vm558 = vweird.f32 %v551
            %vm559 = vweird.f32 %v552
            %vm560 = vmor %vm558, %vm559
            %v561 = vsel %vm560, %v552, %v557
            %v562 = vmul.f32 %v550, %v561
            %563 = vst [vmem:[#allocation5] sm:$0x1] %v562
            %v564 = vld [vmem:[%s4] sm:$0x1]
            %v565 = vmul.f32 %v545, %v562
            %v566 = vsub.f32 %v564, %v565
            %567 = vst [vmem:[#allocation6] sm:$0x1] %v566
          $region64: #{cls_forward.1} parent=59 // pred_fallthru
            _
          %s568 = smul.u32 %s29, 16
          %s569 = scalar_lea.vmem [#allocation2], %s568
          %v570 = vld [vmem:[%s569] sm:$0xff]
          %v571 = vld [vmem:[%s569 + $0x8] sm:$0xff]
          %v572 = vld [vmem:[#allocation5] sm:$0x1]
          %v574 = vperm.slane %v572, 0
          %v576 = vmul.f32 %v570, %v574
          %v577 = vmul.f32 %v571, %v574
          %v578 = vld [vmem:[#allocation6] sm:$0x1]
          %v580 = vperm.slane %v578, 0
          %v582 = vadd.f32 %v576, %v580
          %v583 = vadd.f32 %v577, %v580
          %584 = vst [vmem:[%s355] sm:$0xff] %v582
          %585 = vst [vmem:[%s355 + $0x8] sm:$0xff] %v583
          %v586 = vpack.c.bf16 %v583, %v582
          %v587 = vld [vmem:[%s5] sm:$0xf]
          %v588 = vld [vmem:[%s5 + $0x4] sm:$0xf]
          %v589 = vld [vmem:[%s5 + $0x8] sm:$0xf]
          %v590 = vld [vmem:[%s5 + $0xc] sm:$0xf]
          %v591 = vld [vmem:[%s5 + $0x10] sm:$0xf]
          %v592 = vld [vmem:[%s5 + $0x14] sm:$0xf]
          %v593 = vld [vmem:[%s5 + $0x18] sm:$0xf]
          %v594 = vld [vmem:[%s5 + $0x1c] sm:$0xf]
          %v595 = vld [vmem:[%s5 + $0x20] sm:$0xf]
          %v596 = vld [vmem:[%s5 + $0x24] sm:$0xf]
          %v597 = vld [vmem:[%s5 + $0x28] sm:$0xf]
          %v598 = vld [vmem:[%s5 + $0x2c] sm:$0xf]
          %v599 = vld [vmem:[%s5 + $0x30] sm:$0xf]
          %v600 = vld [vmem:[%s5 + $0x34] sm:$0xf]
          %v601 = vld [vmem:[%s5 + $0x38] sm:$0xf]
          %v602 = vld [vmem:[%s5 + $0x3c] sm:$0xf]
          %v603 = vld [vmem:[%s6] sm:$0x1]
          %v605 = vperm.slane %v603, 0
          %v623 = vunpack.c.l.b16 %v587
          %v624 = vunpack.c.l.b16 %v588
          %v625 = vunpack.c.l.b16 %v589
          %v626 = vunpack.c.l.b16 %v590
          %v627 = vunpack.c.l.b16 %v591
          %v628 = vunpack.c.l.b16 %v592
          %v629 = vunpack.c.l.b16 %v593
          %v630 = vunpack.c.l.b16 %v594
          %v631 = vunpack.c.l.b16 %v595
          %v632 = vunpack.c.l.b16 %v596
          %v633 = vunpack.c.l.b16 %v597
          %v634 = vunpack.c.l.b16 %v598
          %v635 = vunpack.c.l.b16 %v599
          %v636 = vunpack.c.l.b16 %v600
          %v637 = vunpack.c.l.b16 %v601
          %v638 = vunpack.c.l.b16 %v602
          %v639 = vpack.c.b16 %v624, %v623
          %v640 = vpack.c.b16 %v626, %v625
          %v641 = vpack.c.b16 %v628, %v627
          %v642 = vpack.c.b16 %v630, %v629
          %v643 = vpack.c.b16 %v632, %v631
          %v644 = vpack.c.b16 %v634, %v633
          %v645 = vpack.c.b16 %v636, %v635
          %v646 = vpack.c.b16 %v638, %v637
          %655 = vmatpush.bf16.msra.mxu0 %v646
          %656 = vmatpush.bf16.msra.mxu0 %v645
          %657 = vmatpush.bf16.msra.mxu0 %v644
          %658 = vmatpush.bf16.msra.mxu0 %v643
          %659 = vmatpush.bf16.msra.mxu0 %v642
          %660 = vmatpush.bf16.msra.mxu0 %v641
          %661 = vmatpush.bf16.msra.mxu0 %v640
          %662 = vmatpush.bf16.msra.mxu0 %v639
          %663 = vmatmul.bf16.gmra.mxu0 %v586
          %v664 = vpop.f32.mrf.mxu0
          %v665 = vadd.f32 %v605, %v664
          %v666 = vpop.f32.mrf.mxu0
          %v667 = vadd.f32 %v605, %v666
          %668 = vdwg.mxu0
          %669 = vst [vmem:[%s389] sm:$0xff] %v665
          %670 = vst [vmem:[%s389 + $0x8] sm:$0xff] %v667
          %671 = vmax.xlane.f32.xlu0 %v665
          %v672 = vpop.xlane.xlu0 %671
          %673 = vmax.xlane.f32.xlu0 %v667
          %v674 = vpop.xlane.xlu0 %673
          %v675 = vsub.f32 %v665, %v672
          %v676 = vsub.f32 %v667, %v674
          %v677 = vmul.f32 %v675, 1.442695
          %v678 = vpow.pop %v677
          %v679 = vmul.f32 %v676, 1.442695
          %v680 = vpow.pop %v679
          %681 = vadd.xlane.f32.xlu0 %v678
          %v682 = vpop.xlane.xlu0 %681
          %683 = vadd.xlane.f32.xlu0 %v680
          %v684 = vpop.xlane.xlu0 %683
          %v685 = vrcp.pop %v682
          %v686 = vmul.f32 %v682, %v685
          %v687 = vsub.f32 1.0, %v686
          %v688 = vmul.f32 %v685, %v687
          %v689 = vadd.f32 %v685, %v688
          %vm690 = vweird.f32 %v682
          %vm691 = vweird.f32 %v685
          %vm692 = vmor %vm690, %vm691
          %v693 = vsel %vm692, %v685, %v689
          %v694 = vand.u32 2147483647, %v682
          %vm695 = vcmp.eq.f32.partialorder %v694, 8.507059e+37
          %v696 = vand.u32 %v682, 2147483648
          %v697 = vor.u32 1.1754944e-38, %v696
          %v698 = vsel %vm695, %v697, %v693
          %v699 = vmul.f32 1.0, %v698
          %v700 = vrcp.pop %v684
          %v701 = vmul.f32 %v684, %v700
          %v702 = vsub.f32 1.0, %v701
          %v703 = vmul.f32 %v700, %v702
          %v704 = vadd.f32 %v700, %v703
          %vm705 = vweird.f32 %v684
          %vm706 = vweird.f32 %v700
          %vm707 = vmor %vm705, %vm706
          %v708 = vsel %vm707, %v700, %v704
          %v709 = vand.u32 2147483647, %v684
          %vm710 = vcmp.eq.f32.partialorder %v709, 8.507059e+37
          %v711 = vand.u32 %v684, 2147483648
          %v712 = vor.u32 1.1754944e-38, %v711
          %v713 = vsel %vm710, %v712, %v708
          %v714 = vmul.f32 1.0, %v713
          %v715 = vmul.f32 %v678, %v699
          %v716 = vmul.f32 %v680, %v714
          %717 = vst [vmem:[%s397] sm:$0xff] %v715
          %718 = vst [vmem:[%s397 + $0x8] sm:$0xff] %v716
        $region60: #{cls_forward.1} parent=47 // pred_fallthru
          _
        %s719 = sand.u32 %s202, 1
        %s720 = scalar_lea.sflag [#allocation8], %s719
        %s721 = sand.u32 %s202, 1
        %s722 = smul.addr %s721, 16
        %s723 = scalar_lea.vmem [#allocation7], %s722
        %s724 = smul.u32 %s28, %s29
        %s725 = smul.u32 2, %s724
        %p726 = scmp.lt.s32.totalorder %s725, 3
        %s727 = scalar_select %p726, %s725, 3
        %s728 = smul.addr %s727, 8
        %s729 = scalar_lea.vmem %s8, %s728
        %s730 = smul.u32 %s28, %s29
        %s731 = smul.u32 2, %s730
        %p732 = scmp.lt.s32.totalorder %s731, 3
        %s733 = scalar_select %p732, %s731, 3
        %s734 = smul.addr %s733, 8
        %s735 = scalar_lea.vmem %s9, %s734
        // Predicated region
        $region65: #{cls_forward.1} parent=47 // pred_check
          %p736 = pneg %p212
        $region66: #{cls_forward.1} parent=47 // pred_check_branch
          %738 = sbr.rel (%p736) target = $region68
        $region67: #{cls_forward.1} parent=47 // pred_region
          %s739 = smul.u32 %s28, %s29
          %s740 = smul.u32 2, %s739
          %742 = vsyncadd %s720, 0
          %s743 = smul.addr %s740, 8
          %s744 = scalar_lea.hbm %s7, %s743
          %s745 = sshll.u32 %s723, 4
          %s746 = int_to_ptr.vmem [resolvable:$true] %s745
          %s747 = sshll.u32 %s744, 4
          %s748 = int_to_ptr.hbm [resolvable:$true] %s747
          %753 = dma.vmem_to_hbm [thread:$0]  %s746, 256, %s748, %s720, 128, 128, 8
        $region68: #{cls_forward.1} parent=47 // pred_fallthru
          _
        // Predicated region
        $region69: #{cls_forward.1} parent=47 // pred_check
          %p754 = pneg %p240
        $region70: #{cls_forward.1} parent=47 // pred_check_branch
          %756 = sbr.rel (%p754) target = $region72
        $region71: #{cls_forward.1} parent=47 // pred_region
          %s757 = smul.u32 %s28, %s29
          %s758 = smul.u32 2, %s757
        $region72: #{cls_forward.1} parent=47 // pred_fallthru
          _
        // Predicated region
        $region73: #{cls_forward.1} parent=47 // pred_check
          %p759 = pneg %p268
        $region74: #{cls_forward.1} parent=47 // pred_check_branch
          %761 = sbr.rel (%p759) target = $region76
        $region75: #{cls_forward.1} parent=47 // pred_region
          %s762 = smul.u32 %s28, %s29
          %s763 = smul.u32 2, %s762
        $region76: #{cls_forward.1} parent=47 // pred_fallthru
          _
      $region48: #{cls_forward.1} parent=5 // pred_fallthru
        _
      %p764 = scmp.le.s32.totalorder 2, %s19
      // Predicated region
      $region77: #{cls_forward.1} parent=5 // pred_check
        %p765 = pneg %p764
      $region78: #{cls_forward.1} parent=5 // pred_check_branch
        %767 = sbr.rel (%p765) target = $region80
      $region79: #{cls_forward.1} parent=5 // pred_region
        %s768 = ssub.s32 %s19, 2
        // Predicated region
        $region81: #{cls_forward.1} parent=79 // pred_check
          %p769 = pneg %p218
        $region82: #{cls_forward.1} parent=79 // pred_check_branch
          %771 = sbr.rel (%p769) target = $region84
        $region83: #{cls_forward.1} parent=79 // pred_region
          %s772 = sand.u32 %s203, 1
          %s773 = scalar_lea.sflag [#allocation8], %s772
          %s774 = sand.u32 %s203, 1
          %s775 = smul.addr %s774, 16
          %s776 = scalar_lea.vmem [#allocation7], %s775
          %778 = dma.done %s773, 256
        $region84: #{cls_forward.1} parent=79 // pred_fallthru
          _
        // Predicated region
        $region85: #{cls_forward.1} parent=79 // pred_check
          %p779 = pneg %p246
        $region86: #{cls_forward.1} parent=79 // pred_check_branch
          %781 = sbr.rel (%p779) target = $region88
        $region87: #{cls_forward.1} parent=79 // pred_region
          %s782 = smul.u32 %s30, %s31
          %s783 = smul.u32 2, %s782
          %p784 = scmp.lt.s32.totalorder %s783, 3
          %s785 = scalar_select %p784, %s783, 3
          %s786 = smul.addr %s785, 8
          %s787 = scalar_lea.vmem %s8, %s786
        $region88: #{cls_forward.1} parent=79 // pred_fallthru
          _
        // Predicated region
        $region89: #{cls_forward.1} parent=79 // pred_check
          %p788 = pneg %p274
        $region90: #{cls_forward.1} parent=79 // pred_check_branch
          %790 = sbr.rel (%p788) target = $region92
        $region91: #{cls_forward.1} parent=79 // pred_region
          %s791 = smul.u32 %s30, %s31
          %s792 = smul.u32 2, %s791
          %p793 = scmp.lt.s32.totalorder %s792, 3
          %s794 = scalar_select %p793, %s792, 3
          %s795 = smul.addr %s794, 8
          %s796 = scalar_lea.vmem %s9, %s795
        $region92: #{cls_forward.1} parent=79 // pred_fallthru
          _
      $region80: #{cls_forward.1} parent=5 // pred_fallthru
        _
    $region6: #{cls_forward.1} parent=1 // loop_footer
      %s23 = sadd.s32 1, %s19
    $region7: #{cls_forward.1} parent=1 // loop_footer_branch
      %18 = sbr.rel target = $region3
    $region8: #{cls_forward.1} parent=1 // loop_exit
      _
    %797 = vsyncpa [#allocation8], 1
    %s798 = scalar_lea.sflag [#allocation8], 1
    %799 = vsyncpa %s798, 1

</llo_original>
